<compile_context>
chip_gen: v5e
topology: v5e:2x2
jax: 0.10.0
libtpu: 0.0.40
codegen_flags: <defaults>
</compile_context>

<pallas_src>
import math

import jax
import jax.numpy as jnp
from jax.experimental import pallas as pl
from jax.experimental.pallas import tpu as pltpu

FEATURE_SIZE = 16               # window_size / feature_size in the reference
AUTO_HIDDEN = FEATURE_SIZE // 2  # = 8, also the transformer d_model
FF_DIM = 32                     # dim_feedforward of the encoder layer
NOISE_LEVEL = 0.0               # module-level `noise_level`; mask() == identity
LN_EPS = 1e-5

TB_DEFAULT = 2048               # batch tile (lane axis); multiple of 128

# ---- packed parameter slabs -------------------------------------------------
# Matrix slab: (80, 32) f32.  Matrices are stored in "column compute" form
# (y_cols = M @ x_cols, i.e. M = W_row_form^T), stacked along rows at 8-aligned
# offsets and zero-padded to 32 columns.
W_SLAB_ROWS, W_SLAB_COLS = 80, 32
_R_M1, _R_M2, _R_MA, _R_MF1, _R_MF2, _R_ML = 0, 8, 24, 32, 64, 72

# Bias slab: (32, 10) f32.  Bias/LN vectors stored as columns (zero-padded rows).
B_SLAB_ROWS, N_BIAS = 32, 10
_C_B1, _C_B2, _C_C, _C_BF1, _C_BF2, _C_BL, _C_G1, _C_BE1, _C_G2, _C_BE2 = range(10)


def _round_up(n, m):
    return ((n + m - 1) // m) * m


def _net_kernel(x_ref, w_ref, b_ref, out_ref, dec_ref):
    f32 = jnp.float32
    d, F, H = AUTO_HIDDEN, FEATURE_SIZE, FF_DIM

    x = x_ref[...]                                        # (16, TB), batch on lanes

    # --- static slices of the resident parameter slabs ---
    m1 = w_ref[_R_M1:_R_M1 + d, 0:F]                      # (8, 16)  fc1
    m2 = w_ref[_R_M2:_R_M2 + F, 0:d]                      # (16, 8)  fc2
    ma = w_ref[_R_MA:_R_MA + d, 0:d]                      # (8, 8)   folded attn (A^T)
    mf1 = w_ref[_R_MF1:_R_MF1 + H, 0:d]                   # (32, 8)  ff linear1
    mf2 = w_ref[_R_MF2:_R_MF2 + d, 0:H]                   # (8, 32)  ff linear2
    ml = w_ref[_R_ML:_R_ML + 1, 0:d]                      # (1, 8)   final linear

    b1 = b_ref[0:d, _C_B1:_C_B1 + 1]                      # (8, 1)
    b2 = b_ref[0:F, _C_B2:_C_B2 + 1]                      # (16, 1)
    c = b_ref[0:d, _C_C:_C_C + 1]                         # (8, 1)  pe@A + bv@wo + bo
    bf1 = b_ref[0:H, _C_BF1:_C_BF1 + 1]                   # (32, 1)
    bf2 = b_ref[0:d, _C_BF2:_C_BF2 + 1]                   # (8, 1)
    bl = b_ref[0:1, _C_BL:_C_BL + 1]                      # (1, 1)
    g1 = b_ref[0:d, _C_G1:_C_G1 + 1]
    be1 = b_ref[0:d, _C_BE1:_C_BE1 + 1]
    g2 = b_ref[0:d, _C_G2:_C_G2 + 1]
    be2 = b_ref[0:d, _C_BE2:_C_BE2 + 1]

    # --- Autoencoder (mask() is identity since noise_level == 0) ---
    enc = jnp.maximum(jnp.dot(m1, x, preferred_element_type=f32) + b1, 0.0)   # (8, TB)
    dec_ref[...] = jnp.dot(m2, enc, preferred_element_type=f32) + b2          # (16, TB)

    # --- PositionalEncoding + seq_len==1 self-attention + residual, folded:
    #     s = (enc + pe) @ (I + Wv Wo) + (bv Wo + bo)  ==  A^T @ enc + c  (exact)
    s = jnp.dot(ma, enc, preferred_element_type=f32) + c                      # (8, TB)

    # LayerNorm 1 (over the feature/sublane axis)
    mu = jnp.mean(s, axis=0, keepdims=True)
    var = jnp.mean((s - mu) * (s - mu), axis=0, keepdims=True)
    s = (s - mu) * jax.lax.rsqrt(var + LN_EPS) * g1 + be1

    # Feed-forward (relu)
    h = jnp.maximum(jnp.dot(mf1, s, preferred_element_type=f32) + bf1, 0.0)   # (32, TB)
    h = jnp.dot(mf2, h, preferred_element_type=f32) + bf2                     # (8, TB)

    # Residual 2 + LayerNorm 2
    t = s + h
    mu2 = jnp.mean(t, axis=0, keepdims=True)
    var2 = jnp.mean((t - mu2) * (t - mu2), axis=0, keepdims=True)
    t = (t - mu2) * jax.lax.rsqrt(var2 + LN_EPS) * g2 + be2

    # Final Linear(8 -> 1); lane-dense (1, TB) store
    out_ref[...] = jnp.dot(ml, t, preferred_element_type=f32) + bl


def net_forward(x, params, tb=TB_DEFAULT):
    """x: (B, feature_num=1, feature_size=16) -> (out (B, 1), decode (B, 16))."""
    B = x.shape[0]
    x_flat = x.reshape(B, -1).astype(jnp.float32)
    assert x_flat.shape[1] == FEATURE_SIZE, "feature_num * feature_size must be 16"

    TB = tb if B >= tb else _round_up(max(B, 1), 128)
    B_pad = _round_up(B, TB)

    # Transpose so batch sits on the lane axis; zero-pad to a whole number of tiles.
    x_t = jnp.pad(x_flat.T, ((0, 0), (0, B_pad - B)))     # (16, B_pad)

    grid = (pl.cdiv(B_pad, TB),)
    out_t, dec_t = pl.pallas_call(
        _net_kernel,
        grid=grid,
        in_specs=[
            pl.BlockSpec((FEATURE_SIZE, TB), lambda i: (0, i)),          # x tile
            pl.BlockSpec((W_SLAB_ROWS, W_SLAB_COLS), lambda i: (0, 0)),  # resident weights
            pl.BlockSpec((B_SLAB_ROWS, N_BIAS), lambda i: (0, 0)),       # resident biases
        ],
        out_specs=(
            pl.BlockSpec((1, TB), lambda i: (0, i)),                     # out (lane-dense)
            pl.BlockSpec((FEATURE_SIZE, TB), lambda i: (0, i)),          # decode
        ),
        out_shape=(
            jax.ShapeDtypeStruct((1, B_pad), jnp.float32),
            jax.ShapeDtypeStruct((FEATURE_SIZE, B_pad), jnp.float32),
        ),
        compiler_params=pltpu.CompilerParams(
            dimension_semantics=("parallel",)),
    )(x_t, params["wslab"], params["bslab"])

    out = out_t[:, :B].T                                  # (B, 1)
    dec = dec_t[:, :B].T                                  # (B, 16)
    return out, dec


def init_params(key):
    d = AUTO_HIDDEN
    ks = jax.random.split(key, 8)

    def lin(k, fan_in, fan_out):
        # Row-vector form: y = x @ w + b, w: (fan_in, fan_out)
        kw, kb = jax.random.split(k)
        bound = 1.0 / math.sqrt(fan_in)
        w = jax.random.uniform(kw, (fan_in, fan_out), jnp.float32, -bound, bound)
        b = jax.random.uniform(kb, (fan_out,), jnp.float32, -bound, bound)
        return w, b

    # Autoencoder: fc1 (16 -> 8), fc2 (8 -> 16)
    w1, b1 = lin(ks[0], FEATURE_SIZE, d)
    w2, b2 = lin(ks[1], d, FEATURE_SIZE)

    # MultiheadAttention in_proj: only the V block reaches the output when seq_len == 1.
    bound = 1.0 / math.sqrt(d)
    in_proj_w = jax.random.uniform(ks[2], (3 * d, d), jnp.float32, -bound, bound)
    in_proj_b = jax.random.uniform(ks[3], (3 * d,), jnp.float32, -bound, bound)
    wv = in_proj_w[2 * d:3 * d, :].T                      # (d, d): z @ wv == z @ Wv^T
    bv = in_proj_b[2 * d:3 * d]
    wo, bo = lin(ks[4], d, d)                             # out_proj

    # LayerNorms (PyTorch default init)
    g1 = jnp.ones((d,), jnp.float32); be1 = jnp.zeros((d,), jnp.float32)
    g2 = jnp.ones((d,), jnp.float32); be2 = jnp.zeros((d,), jnp.float32)

    # Feed-forward and final linear
    wf1, bf1 = lin(ks[5], d, FF_DIM)
    wf2, bf2 = lin(ks[6], FF_DIM, d)
    wl, bl = lin(ks[7], d, 1)

    # Positional-encoding table (max_len = d_model = 8); forward uses row 0 only.
    position = jnp.arange(d, dtype=jnp.float32)[:, None]
    div_term = jnp.exp(jnp.arange(0, d, 2, dtype=jnp.float32) * (-math.log(10000.0) / d))
    pe = jnp.zeros((d, d), jnp.float32)
    pe = pe.at[:, 0::2].set(jnp.sin(position * div_term))
    pe = pe.at[:, 1::2].set(jnp.cos(position * div_term))
    pe0 = pe[0]                                           # (d,)

    # Fold PE + seq_len==1 attention + residual:  s = enc @ A + c   (exact)
    A = jnp.eye(d, dtype=jnp.float32) + wv @ wo           # (d, d), row form
    c = pe0 @ A + bv @ wo + bo                            # (d,)

    # --- pack the column-compute matrices (W^T) into one slab ---
    mats = [(_R_M1, w1.T), (_R_M2, w2.T), (_R_MA, A.T),
            (_R_MF1, wf1.T), (_R_MF2, wf2.T), (_R_ML, wl.T)]
    wslab = jnp.zeros((W_SLAB_ROWS, W_SLAB_COLS), jnp.float32)
    for row, m in mats:
        wslab = wslab.at[row:row + m.shape[0], :m.shape[1]].set(m)

    # --- pack biases / LN params as columns of one slab ---
    vecs = [b1, b2, c, bf1, bf2, bl, g1, be1, g2, be2]
    bslab = jnp.zeros((B_SLAB_ROWS, N_BIAS), jnp.float32)
    for j, v in enumerate(vecs):
        bslab = bslab.at[:v.shape[0], j].set(v)

    raw = dict(w1=w1, b1=b1, w2=w2, b2=b2, pe0=pe0, wv=wv, bv=bv, wo=wo, bo=bo,
               g1=g1, be1=be1, g2=g2, be2=be2, wf1=wf1, bf1=bf1, wf2=wf2, bf2=bf2,
               wl=wl, bl=bl)
    return dict(wslab=wslab, bslab=bslab, raw=raw)


def reference_forward(x, raw):
    """Plain-JAX reference (unfolded, row-vector layout) for validation."""
    hp = jax.lax.Precision.HIGHEST
    B = x.shape[0]
    xf = x.reshape(B, -1).astype(jnp.float32)
    enc = jnp.maximum(jnp.dot(xf, raw["w1"], precision=hp) + raw["b1"], 0.0)
    dec = jnp.dot(enc, raw["w2"], precision=hp) + raw["b2"]
    z = enc + raw["pe0"]
    v = jnp.dot(z, raw["wv"], precision=hp) + raw["bv"]
    attn = jnp.dot(v, raw["wo"], precision=hp) + raw["bo"]
    s = z + attn
    mu = jnp.mean(s, -1, keepdims=True)
    var = jnp.mean((s - mu) ** 2, -1, keepdims=True)
    s = (s - mu) * jax.lax.rsqrt(var + LN_EPS) * raw["g1"] + raw["be1"]
    h = jnp.maximum(jnp.dot(s, raw["wf1"], precision=hp) + raw["bf1"], 0.0)
    h = jnp.dot(h, raw["wf2"], precision=hp) + raw["bf2"]
    t = s + h
    mu2 = jnp.mean(t, -1, keepdims=True)
    var2 = jnp.mean((t - mu2) ** 2, -1, keepdims=True)
    t = (t - mu2) * jax.lax.rsqrt(var2 + LN_EPS) * raw["g2"] + raw["be2"]
    out = jnp.dot(t, raw["wl"], precision=hp) + raw["bl"]
    return out, dec


if __name__ == "__main__":
    key = jax.random.PRNGKey(0)
    kx, kp = jax.random.split(key)

    B = 2
    # feature_num must be 1 so that x.reshape(B, -1) has width 16 == fc1 input size.
    x = jax.random.normal(kx, (B, 1, FEATURE_SIZE), dtype=jnp.float32)
    params = init_params(kp)

    out, dec = net_forward(x, params)
    jax.block_until_ready((out, dec))
    assert out.shape == (B, 1) and dec.shape == (B, FEATURE_SIZE)
    assert bool(jnp.all(jnp.isfinite(out))) and bool(jnp.all(jnp.isfinite(dec)))

    ref_out, ref_dec = reference_forward(x, params["raw"])
    assert bool(jnp.allclose(out, ref_out, rtol=2e-2, atol=2e-2)), "out mismatch vs reference"
    assert bool(jnp.allclose(dec, ref_dec, rtol=2e-2, atol=2e-2)), "decode mismatch vs reference"

    print("KERNEL_OK")
</pallas_src>

<mosaic_0001>
module attributes {stable_mosaic.version = 11 : i64} {
  func.func @_net_kernel(%arg0: i32, %arg1: memref<16x128xf32, #tpu.memory_space<vmem>>, %arg2: memref<80x32xf32, #tpu.memory_space<vmem>>, %arg3: memref<32x10xf32, #tpu.memory_space<vmem>>, %arg4: memref<1x128xf32, #tpu.memory_space<vmem>>, %arg5: memref<16x128xf32, #tpu.memory_space<vmem>>) attributes {dimension_semantics = [#tpu.dimension_semantics<parallel>], iteration_bounds = array<i64: 1>, scalar_prefetch = 0 : i64, scratch_operands = 0 : i64, tpu.core_type = #tpu.core_type<tc>, window_params = [{transform_indices = @transform_0, window_bounds = array<i64: 16, 128>}, {pipeline_mode = #tpu.pipeline_mode<synchronous>, transform_indices = @transform_1, window_bounds = array<i64: 80, 32>}, {pipeline_mode = #tpu.pipeline_mode<synchronous>, transform_indices = @transform_2, window_bounds = array<i64: 32, 10>}, {transform_indices = @transform_3, window_bounds = array<i64: 1, 128>}, {transform_indices = @transform_4, window_bounds = array<i64: 16, 128>}]} {
    %c0 = arith.constant 0 : index
    %c0_0 = arith.constant 0 : index
    %0 = vector.load %arg1[%c0, %c0_0] : memref<16x128xf32, #tpu.memory_space<vmem>>, vector<16x128xf32>
    %c0_1 = arith.constant 0 : index
    %c0_2 = arith.constant 0 : index
    %1 = vector.load %arg2[%c0_1, %c0_2] : memref<80x32xf32, #tpu.memory_space<vmem>>, vector<8x16xf32>
    %c8 = arith.constant 8 : index
    %c0_3 = arith.constant 0 : index
    %2 = vector.load %arg2[%c8, %c0_3] : memref<80x32xf32, #tpu.memory_space<vmem>>, vector<16x8xf32>
    %c24 = arith.constant 24 : index
    %c0_4 = arith.constant 0 : index
    %3 = vector.load %arg2[%c24, %c0_4] : memref<80x32xf32, #tpu.memory_space<vmem>>, vector<8x8xf32>
    %c32 = arith.constant 32 : index
    %c0_5 = arith.constant 0 : index
    %4 = vector.load %arg2[%c32, %c0_5] : memref<80x32xf32, #tpu.memory_space<vmem>>, vector<32x8xf32>
    %c64 = arith.constant 64 : index
    %c0_6 = arith.constant 0 : index
    %5 = vector.load %arg2[%c64, %c0_6] : memref<80x32xf32, #tpu.memory_space<vmem>>, vector<8x32xf32>
    %c72 = arith.constant 72 : index
    %c0_7 = arith.constant 0 : index
    %6 = vector.load %arg2[%c72, %c0_7] : memref<80x32xf32, #tpu.memory_space<vmem>>, vector<1x8xf32>
    %c0_8 = arith.constant 0 : index
    %c0_9 = arith.constant 0 : index
    %7 = vector.load %arg3[%c0_8, %c0_9] : memref<32x10xf32, #tpu.memory_space<vmem>>, vector<8x1xf32>
    %c0_10 = arith.constant 0 : index
    %c1 = arith.constant 1 : index
    %8 = vector.load %arg3[%c0_10, %c1] : memref<32x10xf32, #tpu.memory_space<vmem>>, vector<16x1xf32>
    %c0_11 = arith.constant 0 : index
    %c2 = arith.constant 2 : index
    %9 = vector.load %arg3[%c0_11, %c2] : memref<32x10xf32, #tpu.memory_space<vmem>>, vector<8x1xf32>
    %c0_12 = arith.constant 0 : index
    %c3 = arith.constant 3 : index
    %10 = vector.load %arg3[%c0_12, %c3] : memref<32x10xf32, #tpu.memory_space<vmem>>, vector<32x1xf32>
    %c0_13 = arith.constant 0 : index
    %c4 = arith.constant 4 : index
    %11 = vector.load %arg3[%c0_13, %c4] : memref<32x10xf32, #tpu.memory_space<vmem>>, vector<8x1xf32>
    %c0_14 = arith.constant 0 : index
    %c5 = arith.constant 5 : index
    %12 = vector.load %arg3[%c0_14, %c5] : memref<32x10xf32, #tpu.memory_space<vmem>>, vector<1x1xf32>
    %c0_15 = arith.constant 0 : index
    %c6 = arith.constant 6 : index
    %13 = vector.load %arg3[%c0_15, %c6] : memref<32x10xf32, #tpu.memory_space<vmem>>, vector<8x1xf32>
    %c0_16 = arith.constant 0 : index
    %c7 = arith.constant 7 : index
    %14 = vector.load %arg3[%c0_16, %c7] : memref<32x10xf32, #tpu.memory_space<vmem>>, vector<8x1xf32>
    %c0_17 = arith.constant 0 : index
    %c8_18 = arith.constant 8 : index
    %15 = vector.load %arg3[%c0_17, %c8_18] : memref<32x10xf32, #tpu.memory_space<vmem>>, vector<8x1xf32>
    %c0_19 = arith.constant 0 : index
    %c9 = arith.constant 9 : index
    %16 = vector.load %arg3[%c0_19, %c9] : memref<32x10xf32, #tpu.memory_space<vmem>>, vector<8x1xf32>
    %cst = arith.constant dense<0.000000e+00> : vector<8x128xf32>
    %17 = tpu.matmul %1, %0, %cst {dimension_numbers = #tpu.dot_dimension_numbers<[1], [0], [0], [1], [0, 0, 1, 1], [], []>} : vector<8x16xf32>, vector<16x128xf32>, vector<8x128xf32> -> vector<8x128xf32>
    %18 = vector.broadcast %7 : vector<8x1xf32> to vector<8x128xf32>
    %19 = arith.addf %17, %18 : vector<8x128xf32>
    %cst_20 = arith.constant 0.000000e+00 : f32
    %20 = vector.broadcast %cst_20 : f32 to vector<8x128xf32>
    %21 = arith.maximumf %19, %20 : vector<8x128xf32>
    %cst_21 = arith.constant dense<0.000000e+00> : vector<16x128xf32>
    %22 = tpu.matmul %2, %21, %cst_21 {dimension_numbers = #tpu.dot_dimension_numbers<[1], [0], [0], [1], [0, 0, 1, 1], [], []>} : vector<16x8xf32>, vector<8x128xf32>, vector<16x128xf32> -> vector<16x128xf32>
    %23 = vector.broadcast %8 : vector<16x1xf32> to vector<16x128xf32>
    %24 = arith.addf %22, %23 : vector<16x128xf32>
    %c0_22 = arith.constant 0 : index
    %c0_23 = arith.constant 0 : index
    %25 = vector.load %arg5[%c0_22, %c0_23] : memref<16x128xf32, #tpu.memory_space<vmem>>, vector<16x128xf32>
    tpu.vector_store %arg5[%c0_22, %c0_23], %24 {strides = array<i32>} : memref<16x128xf32, #tpu.memory_space<vmem>>, vector<16x128xf32>,
    %cst_24 = arith.constant dense<0.000000e+00> : vector<8x128xf32>
    %26 = tpu.matmul %3, %21, %cst_24 {dimension_numbers = #tpu.dot_dimension_numbers<[1], [0], [0], [1], [0, 0, 1, 1], [], []>} : vector<8x8xf32>, vector<8x128xf32>, vector<8x128xf32> -> vector<8x128xf32>
    %27 = vector.broadcast %9 : vector<8x1xf32> to vector<8x128xf32>
    %28 = arith.addf %26, %27 : vector<8x128xf32>
    %cst_25 = arith.constant dense<0.000000e+00> : vector<128xf32>
    %29 = vector.multi_reduction <add>, %28, %cst_25 [0] : vector<8x128xf32> to vector<128xf32>
    %30 = vector.shape_cast %29 : vector<128xf32> to vector<1x128xf32>
    %cst_26 = arith.constant 8.000000e+00 : f32
    %31 = vector.broadcast %cst_26 : f32 to vector<1x128xf32>
    %32 = arith.divf %30, %31 : vector<1x128xf32>
    %33 = vector.broadcast %32 : vector<1x128xf32> to vector<8x128xf32>
    %34 = arith.subf %28, %33 : vector<8x128xf32>
    %35 = vector.broadcast %32 : vector<1x128xf32> to vector<8x128xf32>
    %36 = arith.subf %28, %35 : vector<8x128xf32>
    %37 = arith.mulf %34, %36 : vector<8x128xf32>
    %cst_27 = arith.constant dense<0.000000e+00> : vector<128xf32>
    %38 = vector.multi_reduction <add>, %37, %cst_27 [0] : vector<8x128xf32> to vector<128xf32>
    %39 = vector.shape_cast %38 : vector<128xf32> to vector<1x128xf32>
    %cst_28 = arith.constant 8.000000e+00 : f32
    %40 = vector.broadcast %cst_28 : f32 to vector<1x128xf32>
    %41 = arith.divf %39, %40 : vector<1x128xf32>
    %42 = vector.broadcast %32 : vector<1x128xf32> to vector<8x128xf32>
    %43 = arith.subf %28, %42 : vector<8x128xf32>
    %cst_29 = arith.constant 9.99999974E-6 : f32
    %44 = vector.broadcast %cst_29 : f32 to vector<1x128xf32>
    %45 = arith.addf %41, %44 : vector<1x128xf32>
    %46 = math.rsqrt %45 : vector<1x128xf32>
    %47 = vector.broadcast %46 : vector<1x128xf32> to vector<8x128xf32>
    %48 = arith.mulf %43, %47 : vector<8x128xf32>
    %49 = vector.broadcast %13 : vector<8x1xf32> to vector<8x128xf32>
    %50 = arith.mulf %48, %49 : vector<8x128xf32>
    %51 = vector.broadcast %14 : vector<8x1xf32> to vector<8x128xf32>
    %52 = arith.addf %50, %51 : vector<8x128xf32>
    %cst_30 = arith.constant dense<0.000000e+00> : vector<32x128xf32>
    %53 = tpu.matmul %4, %52, %cst_30 {dimension_numbers = #tpu.dot_dimension_numbers<[1], [0], [0], [1], [0, 0, 1, 1], [], []>} : vector<32x8xf32>, vector<8x128xf32>, vector<32x128xf32> -> vector<32x128xf32>
    %54 = vector.broadcast %10 : vector<32x1xf32> to vector<32x128xf32>
    %55 = arith.addf %53, %54 : vector<32x128xf32>
    %cst_31 = arith.constant 0.000000e+00 : f32
    %56 = vector.broadcast %cst_31 : f32 to vector<32x128xf32>
    %57 = arith.maximumf %55, %56 : vector<32x128xf32>
    %cst_32 = arith.constant dense<0.000000e+00> : vector<8x128xf32>
    %58 = tpu.matmul %5, %57, %cst_32 {dimension_numbers = #tpu.dot_dimension_numbers<[1], [0], [0], [1], [0, 0, 1, 1], [], []>} : vector<8x32xf32>, vector<32x128xf32>, vector<8x128xf32> -> vector<8x128xf32>
    %59 = vector.broadcast %11 : vector<8x1xf32> to vector<8x128xf32>
    %60 = arith.addf %58, %59 : vector<8x128xf32>
    %61 = arith.addf %52, %60 : vector<8x128xf32>
    %cst_33 = arith.constant dense<0.000000e+00> : vector<128xf32>
    %62 = vector.multi_reduction <add>, %61, %cst_33 [0] : vector<8x128xf32> to vector<128xf32>
    %63 = vector.shape_cast %62 : vector<128xf32> to vector<1x128xf32>
    %cst_34 = arith.constant 8.000000e+00 : f32
    %64 = vector.broadcast %cst_34 : f32 to vector<1x128xf32>
    %65 = arith.divf %63, %64 : vector<1x128xf32>
    %66 = vector.broadcast %65 : vector<1x128xf32> to vector<8x128xf32>
    %67 = arith.subf %61, %66 : vector<8x128xf32>
    %68 = vector.broadcast %65 : vector<1x128xf32> to vector<8x128xf32>
    %69 = arith.subf %61, %68 : vector<8x128xf32>
    %70 = arith.mulf %67, %69 : vector<8x128xf32>
    %cst_35 = arith.constant dense<0.000000e+00> : vector<128xf32>
    %71 = vector.multi_reduction <add>, %70, %cst_35 [0] : vector<8x128xf32> to vector<128xf32>
    %72 = vector.shape_cast %71 : vector<128xf32> to vector<1x128xf32>
    %cst_36 = arith.constant 8.000000e+00 : f32
    %73 = vector.broadcast %cst_36 : f32 to vector<1x128xf32>
    %74 = arith.divf %72, %73 : vector<1x128xf32>
    %75 = vector.broadcast %65 : vector<1x128xf32> to vector<8x128xf32>
    %76 = arith.subf %61, %75 : vector<8x128xf32>
    %cst_37 = arith.constant 9.99999974E-6 : f32
    %77 = vector.broadcast %cst_37 : f32 to vector<1x128xf32>
    %78 = arith.addf %74, %77 : vector<1x128xf32>
    %79 = math.rsqrt %78 : vector<1x128xf32>
    %80 = vector.broadcast %79 : vector<1x128xf32> to vector<8x128xf32>
    %81 = arith.mulf %76, %80 : vector<8x128xf32>
    %82 = vector.broadcast %15 : vector<8x1xf32> to vector<8x128xf32>
    %83 = arith.mulf %81, %82 : vector<8x128xf32>
    %84 = vector.broadcast %16 : vector<8x1xf32> to vector<8x128xf32>
    %85 = arith.addf %83, %84 : vector<8x128xf32>
    %cst_38 = arith.constant dense<0.000000e+00> : vector<1x128xf32>
    %86 = tpu.matmul %6, %85, %cst_38 {dimension_numbers = #tpu.dot_dimension_numbers<[1], [0], [0], [1], [0, 0, 1, 1], [], []>} : vector<1x8xf32>, vector<8x128xf32>, vector<1x128xf32> -> vector<1x128xf32>
    %87 = vector.broadcast %12 : vector<1x1xf32> to vector<1x128xf32>
    %88 = arith.addf %86, %87 : vector<1x128xf32>
    %c0_39 = arith.constant 0 : index
    %c0_40 = arith.constant 0 : index
    %89 = vector.load %arg4[%c0_39, %c0_40] : memref<1x128xf32, #tpu.memory_space<vmem>>, vector<1x128xf32>
    tpu.vector_store %arg4[%c0_39, %c0_40], %88 {strides = array<i32>} : memref<1x128xf32, #tpu.memory_space<vmem>>, vector<1x128xf32>,
    return
  }
  func.func @transform_0(%arg0: i32) -> (i32, i32) {
    %c0_i32 = arith.constant 0 : i32
    %c0_i32_0 = arith.constant 0 : i32
    return %c0_i32, %arg0 : i32, i32
  }
  func.func @transform_1(%arg0: i32) -> (i32, i32) {
    %c0_i32 = arith.constant 0 : i32
    %c0_i32_0 = arith.constant 0 : i32
    %c0_i32_1 = arith.constant 0 : i32
    return %c0_i32, %c0_i32_0 : i32, i32
  }
  func.func @transform_2(%arg0: i32) -> (i32, i32) {
    %c0_i32 = arith.constant 0 : i32
    %c0_i32_0 = arith.constant 0 : i32
    %c0_i32_1 = arith.constant 0 : i32
    return %c0_i32, %c0_i32_0 : i32, i32
  }
  func.func @transform_3(%arg0: i32) -> (i32, i32) {
    %c0_i32 = arith.constant 0 : i32
    %c0_i32_0 = arith.constant 0 : i32
    return %c0_i32, %arg0 : i32, i32
  }
  func.func @transform_4(%arg0: i32) -> (i32, i32) {
    %c0_i32 = arith.constant 0 : i32
    %c0_i32_0 = arith.constant 0 : i32
    return %c0_i32, %arg0 : i32, i32
  }
}

</mosaic_0001>

<llo_original>
// kernel: tpu_custom_call.1
$region0: #{tpu_custom_call.1}
  #allocation0 [shape = 'u32[]', space=smem, size = 0x4, offset = 0x4, fixed_abs, tag = 'smem constant byte address 0x4 - core index']
  #allocation1 [shape = 'u32[72,128]{1,0:T(1,128)}', space=vmem, size = 0x9000, scoped, tag = 'internal scratch']
  %s0 = inlined_call_operand.vmem [shape: f32[16,128], index: 0, kind: input, shape index: {}]
  %s1 = inlined_call_operand.vmem [shape: f32[80,32], index: 1, kind: input, shape index: {}]
  %s2 = inlined_call_operand.vmem [shape: f32[32,10], index: 2, kind: input, shape index: {}]
  %s3 = inlined_call_operand.hbm [shape: f32[1,128], index: 3, kind: output, shape index: {0}]
  %s4 = inlined_call_operand.hbm [shape: f32[16,128], index: 4, kind: output, shape index: {1}]
  %5 = xla_tuple %s3, %s4
  %s6 = sld [smem:[#allocation0]]
  $region30: #{tpu_custom_call.1} parent=0
    _
  %s8 = ssub.s32 1, %s6
  %s9 = scalar_select 0, %s8, %s6
  $region1: #{tpu_custom_call.1} parent=0
    #allocation2 [shape = 'u8[512]{0}', space=vmem, size = 0x400, scoped, tag = 'output window, operand 0, single buffered']
    #allocation3 [shape = 's32[1]{0}', space=sflag, size = 0x4, scoped, tag = 'scoped memory for tpu_custom_call.1']
    #allocation4 [shape = 'u8[8192]{0}', space=vmem, size = 0x2000, scoped, tag = 'output window, operand 1, single buffered']
    #allocation5 [shape = 's32[1]{0}', space=sflag, size = 0x4, scoped, tag = 'scoped memory for tpu_custom_call.1']
    %10 = vsyncpa [#allocation3], 0
    %11 = vsyncpa [#allocation5], 0
    // Predicated region
    $region2: #{tpu_custom_call.1} parent=1 // pred_check
      _
    $region3: #{tpu_custom_call.1} parent=1 // pred_check_branch
      %13 = sbr.rel (0) target = $region5
    $region4: #{tpu_custom_call.1} parent=1 // pred_region
      _
    $region5: #{tpu_custom_call.1} parent=1 // pred_fallthru
      _
    // Predicated region
    $region6: #{tpu_custom_call.1} parent=1 // pred_check
      _
    $region7: #{tpu_custom_call.1} parent=1 // pred_check_branch
      %15 = sbr.rel (0) target = $region9
    $region8: #{tpu_custom_call.1} parent=1 // pred_region
      _
    $region9: #{tpu_custom_call.1} parent=1 // pred_fallthru
      _
    // Predicated region
    $region10: #{tpu_custom_call.1} parent=1 // pred_check
      _
    $region11: #{tpu_custom_call.1} parent=1 // pred_check_branch
      %17 = sbr.rel (0) target = $region13
    $region12: #{tpu_custom_call.1} parent=1 // pred_region
      _
    $region13: #{tpu_custom_call.1} parent=1 // pred_fallthru
      _
    %v18 = vld [vmem:[%s0] sm:$0xff]
    %v19 = vld [vmem:[%s0 + $0x8] sm:$0xff]
    %v20 = vld [vmem:[%s1] sm:$0xff]
    %v21 = vld [vmem:[%s1 + $0x8] sm:$0xff]
    %v22 = vld [vmem:[%s1 + $0x10] sm:$0xff]
    %v23 = vld [vmem:[%s1 + $0x18] sm:$0xff]
    %v24 = vld [vmem:[%s1 + $0x20] sm:$0xff]
    %v25 = vld [vmem:[%s1 + $0x28] sm:$0xff]
    %v26 = vld [vmem:[%s1 + $0x30] sm:$0xff]
    %v27 = vld [vmem:[%s1 + $0x38] sm:$0xff]
    %v28 = vld [vmem:[%s1 + $0x40] sm:$0xff]
    %v29 = vld [vmem:[%s1 + $0x48] sm:$0x1]
    %v30 = vld [vmem:[%s2] sm:$0xff]
    %v31 = vld [vmem:[%s2 + $0x8] sm:$0xff]
    %v32 = vld [vmem:[%s2 + $0x10] sm:$0xff]
    %v33 = vld [vmem:[%s2 + $0x18] sm:$0xff]
    %v34 = vld [vmem:[%s2] sm:$0x1]
    %36 = vset.pattern.permute.xlu0 0
    %37 = vperm.xlu0 %36, %v30
    %v38 = vpop.permute.xlu0 %37
    %vm40 = vcmask 130048
    %v42 = vsel %vm40, %v20, 0
    %44 = vmatpush.msra.mxu0 0.0
    %45 = vmatpush.msra.mxu0 0.0
    %46 = vmatpush.msra.mxu0 0.0
    %47 = vmatpush.msra.mxu0 0.0
    %48 = vmatpush.msra.mxu0 0.0
    %49 = vmatpush.msra.mxu0 0.0
    %50 = vmatpush.msra.mxu0 0.0
    %51 = vmatpush.msra.mxu0 0.0
    %52 = vmatpush.msra.mxu0 0.0
    %53 = vmatpush.msra.mxu0 0.0
    %54 = vmatpush.msra.mxu0 0.0
    %55 = vmatpush.msra.mxu0 0.0
    %56 = vmatpush.msra.mxu0 0.0
    %57 = vmatpush.msra.mxu0 0.0
    %58 = vmatpush.msra.mxu0 %v19
    %59 = vmatpush.msra.mxu0 %v18
    %60 = vmatmul.f32.gmra.mxu0 %v42
    %v61 = vpop.f32.mrf.mxu0
    %v62 = vadd.f32 %v38, %v61
    %63 = vdwg.mxu0
    %v64 = vmax.f32 %v62, 0.0
    %65 = vset.pattern.permute.xlu0 1
    %66 = vperm.xlu0 %65, %v30
    %v67 = vpop.permute.xlu0 %66
    %70 = vset.pattern.permute.xlu0 1
    %71 = vperm.xlu0 %70, %v31
    %v72 = vpop.permute.xlu0 %71
    %vm74 = vcmask 64512
    %v76 = vsel %vm74, %v21, 0
    %v79 = vsel %vm74, %v22, 0
    %81 = vmatpush.msra.mxu0 0.0
    %82 = vmatpush.msra.mxu0 0.0
    %83 = vmatpush.msra.mxu0 0.0
    %84 = vmatpush.msra.mxu0 0.0
    %85 = vmatpush.msra.mxu0 0.0
    %86 = vmatpush.msra.mxu0 0.0
    %87 = vmatpush.msra.mxu0 0.0
    %88 = vmatpush.msra.mxu0 0.0
    %89 = vmatpush.msra.mxu0 0.0
    %90 = vmatpush.msra.mxu0 0.0
    %91 = vmatpush.msra.mxu0 0.0
    %92 = vmatpush.msra.mxu0 0.0
    %93 = vmatpush.msra.mxu0 0.0
    %94 = vmatpush.msra.mxu0 0.0
    %95 = vmatpush.msra.mxu0 0.0
    %96 = vmatpush.msra.mxu0 %v64
    %97 = vmatmul.f32.gmra.mxu0 %v76
    %v98 = vpop.f32.mrf.mxu0
    %v99 = vadd.f32 %v67, %v98
    %100 = vmatmul.f32.gmra.mxu0 %v79
    %v101 = vpop.f32.mrf.mxu0
    %v102 = vadd.f32 %v72, %v101
    %103 = vdwg.mxu0
    %104 = vst [vmem:[#allocation4] sm:$0xff] %v99
    %105 = vst [vmem:[#allocation4 + $0x8] sm:$0xff] %v102
    %106 = vset.pattern.permute.xlu0 2
    %107 = vperm.xlu0 %106, %v30
    %v108 = vpop.permute.xlu0 %107
    %v111 = vsel %vm74, %v23, 0
    %113 = vmatpush.msra.mxu0 0.0
    %114 = vmatpush.msra.mxu0 0.0
    %115 = vmatpush.msra.mxu0 0.0
    %116 = vmatpush.msra.mxu0 0.0
    %117 = vmatpush.msra.mxu0 0.0
    %118 = vmatpush.msra.mxu0 0.0
    %119 = vmatpush.msra.mxu0 0.0
    %120 = vmatpush.msra.mxu0 0.0
    %121 = vmatpush.msra.mxu0 0.0
    %122 = vmatpush.msra.mxu0 0.0
    %123 = vmatpush.msra.mxu0 0.0
    %124 = vmatpush.msra.mxu0 0.0
    %125 = vmatpush.msra.mxu0 0.0
    %126 = vmatpush.msra.mxu0 0.0
    %127 = vmatpush.msra.mxu0 0.0
    %128 = vmatpush.msra.mxu0 %v64
    %129 = vmatmul.f32.gmra.mxu0 %v111
    %v130 = vpop.f32.mrf.mxu0
    %v131 = vadd.f32 %v108, %v130
    %132 = vdwg.mxu0
    %v133 = vrot.slane %v131, 4
    %v134 = vadd.f32 %v131, %v133
    %v135 = vrot.slane %v134, 2
    %v136 = vadd.f32 %v134, %v135
    %v137 = vrot.slane %v136, 1
    %v138 = vadd.f32 %v136, %v137
    %v139 = vrcp.pop 8.0
    %v140 = vmul.f32 8.0, %v139
    %v141 = vsub.f32 1.0, %v140
    %v142 = vmul.f32 %v139, %v141
    %v143 = vadd.f32 %v139, %v142
    %vm144 = vweird.f32 %v139
    %v145 = vsel %vm144, %v139, %v143
    %v146 = vmul.f32 %v138, %v145
    %v147 = vsub.f32 %v131, %v146
    %v148 = vmul.f32 %v147, %v147
    %v149 = vrot.slane %v148, 4
    %v150 = vadd.f32 %v148, %v149
    %v151 = vrot.slane %v150, 2
    %v152 = vadd.f32 %v150, %v151
    %v153 = vrot.slane %v152, 1
    %v154 = vadd.f32 %v152, %v153
    %v155 = vmul.f32 %v154, %v145
    %v156 = vadd.f32 %v155, 1e-05
    %v157 = vrsqrt.pop %v156
    %v158 = vmul.f32 %v157, %v156
    %v159 = vmul.f32 %v158, %v157
    %v160 = vmul.f32 0.5, %v159
    %v161 = vsub.f32 1.5, %v160
    %v162 = vmul.f32 %v157, %v161
    %vm163 = vweird.f32 %v156
    %vm164 = vweird.f32 %v157
    %vm165 = vmor %vm163, %vm164
    %v166 = vsel %vm165, %v157, %v162
    %v167 = vmul.f32 %v147, %v166
    %168 = vset.pattern.permute.xlu0 6
    %169 = vperm.xlu0 %168, %v30
    %v170 = vpop.permute.xlu0 %169
    %v172 = vmul.f32 %v167, %v170
    %173 = vset.pattern.permute.xlu0 7
    %174 = vperm.xlu0 %173, %v30
    %v175 = vpop.permute.xlu0 %174
    %v177 = vadd.f32 %v172, %v175
    %178 = vset.pattern.permute.xlu0 3
    %179 = vperm.xlu0 %178, %v30
    %v180 = vpop.permute.xlu0 %179
    %182 = vset.pattern.permute.xlu0 3
    %183 = vperm.xlu0 %182, %v31
    %v184 = vpop.permute.xlu0 %183
    %187 = vset.pattern.permute.xlu0 3
    %188 = vperm.xlu0 %187, %v32
    %v189 = vpop.permute.xlu0 %188
    %192 = vset.pattern.permute.xlu0 3
    %193 = vperm.xlu0 %192, %v33
    %v194 = vpop.permute.xlu0 %193
    %v197 = vsel %vm74, %v24, 0
    %v200 = vsel %vm74, %v25, 0
    %v203 = vsel %vm74, %v26, 0
    %v206 = vsel %vm74, %v27, 0
    %208 = vmatpush.msra.mxu0 0.0
    %209 = vmatpush.msra.mxu0 0.0
    %210 = vmatpush.msra.mxu0 0.0
    %211 = vmatpush.msra.mxu0 0.0
    %212 = vmatpush.msra.mxu0 0.0
    %213 = vmatpush.msra.mxu0 0.0
    %214 = vmatpush.msra.mxu0 0.0
    %215 = vmatpush.msra.mxu0 0.0
    %216 = vmatpush.msra.mxu0 0.0
    %217 = vmatpush.msra.mxu0 0.0
    %218 = vmatpush.msra.mxu0 0.0
    %219 = vmatpush.msra.mxu0 0.0
    %220 = vmatpush.msra.mxu0 0.0
    %221 = vmatpush.msra.mxu0 0.0
    %222 = vmatpush.msra.mxu0 0.0
    %223 = vmatpush.msra.mxu0 %v177
    %224 = vmatmul.f32.gmra.mxu0 %v197
    %v225 = vpop.f32.mrf.mxu0
    %v226 = vadd.f32 %v180, %v225
    %227 = vmatmul.f32.gmra.mxu0 %v200
    %v228 = vpop.f32.mrf.mxu0
    %v229 = vadd.f32 %v184, %v228
    %230 = vmatmul.f32.gmra.mxu0 %v203
    %v231 = vpop.f32.mrf.mxu0
    %v232 = vadd.f32 %v189, %v231
    %233 = vmatmul.f32.gmra.mxu0 %v206
    %v234 = vpop.f32.mrf.mxu0
    %v235 = vadd.f32 %v194, %v234
    %236 = vdwg.mxu0
    %v237 = vmax.f32 %v226, 0.0
    %v238 = vmax.f32 %v229, 0.0
    %v239 = vmax.f32 %v232, 0.0
    %v240 = vmax.f32 %v235, 0.0
    %241 = vset.pattern.permute.xlu0 4
    %242 = vperm.xlu0 %241, %v30
    %v243 = vpop.permute.xlu0 %242
    %vm245 = vcmask 261120
    %v247 = vsel %vm245, %v28, 0
    %249 = vmatpush.msra.mxu0 0.0
    %250 = vmatpush.msra.mxu0 0.0
    %251 = vmatpush.msra.mxu0 0.0
    %252 = vmatpush.msra.mxu0 0.0
    %253 = vmatpush.msra.mxu0 0.0
    %254 = vmatpush.msra.mxu0 0.0
    %255 = vmatpush.msra.mxu0 0.0
    %256 = vmatpush.msra.mxu0 0.0
    %257 = vmatpush.msra.mxu0 0.0
    %258 = vmatpush.msra.mxu0 0.0
    %259 = vmatpush.msra.mxu0 0.0
    %260 = vmatpush.msra.mxu0 0.0
    %261 = vmatpush.msra.mxu0 %v240
    %262 = vmatpush.msra.mxu0 %v239
    %263 = vmatpush.msra.mxu0 %v238
    %264 = vmatpush.msra.mxu0 %v237
    %265 = vmatmul.f32.gmra.mxu0 %v247
    %v266 = vpop.f32.mrf.mxu0
    %v267 = vadd.f32 %v243, %v266
    %268 = vdwg.mxu0
    %v269 = vadd.f32 %v177, %v267
    %v270 = vrot.slane %v269, 4
    %v271 = vadd.f32 %v269, %v270
    %v272 = vrot.slane %v271, 2
    %v273 = vadd.f32 %v271, %v272
    %v274 = vrot.slane %v273, 1
    %v275 = vadd.f32 %v273, %v274
    %v276 = vmul.f32 %v275, %v145
    %v277 = vsub.f32 %v269, %v276
    %v278 = vmul.f32 %v277, %v277
    %v279 = vrot.slane %v278, 4
    %v280 = vadd.f32 %v278, %v279
    %v281 = vrot.slane %v280, 2
    %v282 = vadd.f32 %v280, %v281
    %v283 = vrot.slane %v282, 1
    %v284 = vadd.f32 %v282, %v283
    %v285 = vmul.f32 %v284, %v145
    %v286 = vadd.f32 %v285, 1e-05
    %v287 = vrsqrt.pop %v286
    %v288 = vmul.f32 %v287, %v286
    %v289 = vmul.f32 %v288, %v287
    %v290 = vmul.f32 0.5, %v289
    %v291 = vsub.f32 1.5, %v290
    %v292 = vmul.f32 %v287, %v291
    %vm293 = vweird.f32 %v286
    %vm294 = vweird.f32 %v287
    %vm295 = vmor %vm293, %vm294
    %v296 = vsel %vm295, %v287, %v292
    %v297 = vmul.f32 %v277, %v296
    %298 = vset.pattern.permute.xlu0 8
    %299 = vperm.xlu0 %298, %v30
    %v300 = vpop.permute.xlu0 %299
    %v302 = vmul.f32 %v297, %v300
    %303 = vset.pattern.permute.xlu0 9
    %304 = vperm.xlu0 %303, %v30
    %v305 = vpop.permute.xlu0 %304
    %v307 = vadd.f32 %v302, %v305
    %309 = vset.pattern.permute.xlu0 5
    %310 = vperm.xlu0 %309, %v34
    %v311 = vpop.permute.xlu0 %310
    %v314 = vsel %vm74, %v29, 0
    %316 = vmatpush.msra.mxu0 0.0
    %317 = vmatpush.msra.mxu0 0.0
    %318 = vmatpush.msra.mxu0 0.0
    %319 = vmatpush.msra.mxu0 0.0
    %320 = vmatpush.msra.mxu0 0.0
    %321 = vmatpush.msra.mxu0 0.0
    %322 = vmatpush.msra.mxu0 0.0
    %323 = vmatpush.msra.mxu0 0.0
    %324 = vmatpush.msra.mxu0 0.0
    %325 = vmatpush.msra.mxu0 0.0
    %326 = vmatpush.msra.mxu0 0.0
    %327 = vmatpush.msra.mxu0 0.0
    %328 = vmatpush.msra.mxu0 0.0
    %329 = vmatpush.msra.mxu0 0.0
    %330 = vmatpush.msra.mxu0 0.0
    %331 = vmatpush.msra.mxu0 %v307
    %332 = vmatmul.f32.gmra.mxu0 %v314
    %v333 = vpop.f32.mrf.mxu0
    %v334 = vadd.f32 %v311, %v333
    %335 = vdwg.mxu0
    %336 = vst [vmem:[#allocation2] sm:$0x1] %v334
    // Predicated region
    $region14: #{tpu_custom_call.1} parent=1 // pred_check
      _
    $region15: #{tpu_custom_call.1} parent=1 // pred_check_branch
      %338 = sbr.rel (0) target = $region17
    $region16: #{tpu_custom_call.1} parent=1 // pred_region
      %340 = vsyncadd [#allocation3], 0
      %s342 = sshll.u32 [#allocation2], 4
      %s343 = int_to_ptr.vmem [resolvable:$true] %s342
      %s344 = sshll.u32 %s3, 4
      %s345 = int_to_ptr.hbm [resolvable:$true] %s344
      %347 = dma.vmem_to_hbm [thread:$0]  %s343, 16, %s345, [#allocation3]
    $region17: #{tpu_custom_call.1} parent=1 // pred_fallthru
      _
    // Predicated region
    $region18: #{tpu_custom_call.1} parent=1 // pred_check
      _
    $region19: #{tpu_custom_call.1} parent=1 // pred_check_branch
      %349 = sbr.rel (0) target = $region21
    $region20: #{tpu_custom_call.1} parent=1 // pred_region
      %351 = vsyncadd [#allocation5], 0
      %s352 = sshll.u32 [#allocation4], 4
      %s353 = int_to_ptr.vmem [resolvable:$true] %s352
      %s354 = sshll.u32 %s4, 4
      %s355 = int_to_ptr.hbm [resolvable:$true] %s354
      %360 = dma.vmem_to_hbm [thread:$0]  %s353, 256, %s355, [#allocation5], 128, 128, 8
    $region21: #{tpu_custom_call.1} parent=1 // pred_fallthru
      _
    // Predicated region
    $region22: #{tpu_custom_call.1} parent=1 // pred_check
      _
    $region23: #{tpu_custom_call.1} parent=1 // pred_check_branch
      %362 = sbr.rel (0) target = $region25
    $region24: #{tpu_custom_call.1} parent=1 // pred_region
      %364 = dma.done [#allocation3], 16
    $region25: #{tpu_custom_call.1} parent=1 // pred_fallthru
      _
    // Predicated region
    $region26: #{tpu_custom_call.1} parent=1 // pred_check
      _
    $region27: #{tpu_custom_call.1} parent=1 // pred_check_branch
      %366 = sbr.rel (0) target = $region29
    $region28: #{tpu_custom_call.1} parent=1 // pred_region
      %368 = dma.done [#allocation5], 256
    $region29: #{tpu_custom_call.1} parent=1 // pred_fallthru
      _
    %369 = vsyncpa [#allocation3], 1
    %370 = vsyncpa [#allocation5], 1

</llo_original>
